<compile_context>
chip_gen: v7x
topology: tpu7x:2x2x1
jax: 0.10.0
libtpu: 0.0.40
codegen_flags: <defaults>
</compile_context>

<pallas_src>
import functools

import jax
import jax.numpy as jnp
from jax import lax
from jax.experimental import pallas as pl
from jax.experimental.pallas import tpu as pltpu


def _round_up(n: int, m: int) -> int:
    return ((n + m - 1) // m) * m


def residual_connection_kernel(x_ref, bits_ref, alpha_ref, beta_ref, w_ref,
                               b_ref, o_ref, *, eps, dropout_p, valid_features):
    """One row-tile: out = x + dropout(linear(layernorm(x)))."""
    x = x_ref[...].astype(jnp.float32)                 # (TR, Fp), f32 elementwise path
    feat = valid_features                              # real (unpadded) feature count
    fp = x.shape[-1]                                   # padded feature count

    # ---- LayerNormalization (torch semantics: unbiased std, (std - eps) denom)
    mean = jnp.sum(x, axis=-1, keepdims=True) * (1.0 / feat)   # pad cols are zero
    diff = x - mean
    if fp != feat:
        # Zero out padded feature columns so they do not pollute the variance.
        col = lax.broadcasted_iota(jnp.int32, (1, fp), 1)
        diff = jnp.where(col < feat, diff, 0.0)
    var = jnp.sum(diff * diff, axis=-1, keepdims=True) * (1.0 / (feat - 1))  # ddof=1
    std = jnp.sqrt(var)
    inv = 1.0 / (std - eps)                            # one divide per row, not per element
    normed = alpha_ref[...] * (diff * inv) + beta_ref[...]

    # ---- sublayer: Linear(F -> F) on the MXU (bf16 inputs, f32 accumulation)
    y = jnp.dot(normed.astype(jnp.bfloat16), w_ref[...],
                preferred_element_type=jnp.float32)
    y = y + b_ref[...]

    # ---- inverted dropout (training semantics), keep-decision in integer domain
    if dropout_p > 0.0:
        thr = jnp.uint32(min(int(round(dropout_p * (2 ** 32))), 2 ** 32 - 1))
        keep = bits_ref[...] >= thr                    # P(keep) = 1 - dropout_p
        y = jnp.where(keep, y * (1.0 / (1.0 - dropout_p)), 0.0)

    # ---- residual add, lane-dense store
    o_ref[...] = (x + y).astype(o_ref.dtype)


def residual_connection(x, alpha, beta, w, b, dropout_key, *,
                        eps=1e-6, dropout_p=0.1, row_tile=512):
    """x: (B, S, F).  alpha/beta/b: (F,).  w: (F, F).  dropout_key: jax PRNG key."""
    B, S, F = x.shape
    N = B * S

    # Pad features to a lane-aligned width and rows to a multiple of the tile.
    Fp = _round_up(F, 128)
    row_tile = min(row_tile, _round_up(N, 8))          # sublane-aligned tile, <= problem
    Np = _round_up(N, row_tile)

    x2 = jnp.pad(x.reshape(N, F), ((0, Np - N), (0, Fp - F)))
    alpha_p = jnp.pad(alpha, (0, Fp - F)).reshape(1, Fp)
    beta_p = jnp.pad(beta, (0, Fp - F)).reshape(1, Fp)
    b_p = jnp.pad(b, (0, Fp - F)).reshape(1, Fp)
    w_p = jnp.pad(w, ((0, Fp - F), (0, Fp - F))).astype(jnp.bfloat16)

    # Dropout randomness generated outside the kernel (platform-portable);
    # semantics (Bernoulli keep prob 1-p, 1/(1-p) scale) match nn.Dropout train mode.
    bits = jax.random.bits(dropout_key, (Np, Fp), dtype=jnp.uint32)

    kernel = functools.partial(residual_connection_kernel,
                               eps=eps, dropout_p=dropout_p, valid_features=F)

    out = pl.pallas_call(
        kernel,
        out_shape=jax.ShapeDtypeStruct((Np, Fp), x.dtype),
        grid=(Np // row_tile,),
        in_specs=[
            pl.BlockSpec((row_tile, Fp), lambda i: (i, 0)),   # x tile
            pl.BlockSpec((row_tile, Fp), lambda i: (i, 0)),   # dropout random bits
            pl.BlockSpec((1, Fp),        lambda i: (0, 0)),   # alpha
            pl.BlockSpec((1, Fp),        lambda i: (0, 0)),   # beta (LN bias)
            pl.BlockSpec((Fp, Fp),       lambda i: (0, 0)),   # sublayer W (bf16)
            pl.BlockSpec((1, Fp),        lambda i: (0, 0)),   # sublayer b
        ],
        out_specs=pl.BlockSpec((row_tile, Fp), lambda i: (i, 0)),
        compiler_params=pltpu.CompilerParams(
            dimension_semantics=("parallel",),          # row tiles are independent
            vmem_limit_bytes=48 * 1024 * 1024),
    )(x2, bits, alpha_p, beta_p, w_p, b_p)

    return out[:N, :F].reshape(B, S, F)


if __name__ == "__main__":
    # Small shapes consistent with the module: (batch=2, seq=8, features=32)
    B, S, F = 2, 8, 32
    key = jax.random.PRNGKey(0)
    kx, kw, kb, kd = jax.random.split(key, 4)

    x = jax.random.normal(kx, (B, S, F), dtype=jnp.float32)

    # LayerNormalization params exactly as nn.Module __init__: ones / zeros.
    alpha = jnp.ones((F,), dtype=jnp.float32)
    beta = jnp.zeros((F,), dtype=jnp.float32)

    # Deterministic sublayer (Linear F->F) parameters.
    w = jax.random.normal(kw, (F, F), dtype=jnp.float32) / jnp.sqrt(F)
    b = jax.random.normal(kb, (F,), dtype=jnp.float32) * 0.1

    out = residual_connection(x, alpha, beta, w, b, kd,
                              eps=1e-6, dropout_p=0.1, row_tile=512)
    jax.block_until_ready(out)
    assert out.shape == (B, S, F) and out.dtype == x.dtype
    # TODO(synk): torch's dropout RNG stream cannot be bit-matched; Bernoulli
    # keep-prob (1-p) and 1/(1-p) scaling semantics are reproduced instead.
    print("KERNEL_OK")
</pallas_src>

<mosaic_0001>
module attributes {stable_mosaic.version = 11 : i64} {
  func.func @residual_connection_kernel(%arg0: i32, %arg1: memref<16x128xf32, #tpu.memory_space<vmem>>, %arg2: memref<16x128xi32, #tpu.memory_space<vmem>>, %arg3: memref<1x128xf32, #tpu.memory_space<vmem>>, %arg4: memref<1x128xf32, #tpu.memory_space<vmem>>, %arg5: memref<128x128xbf16, #tpu.memory_space<vmem>>, %arg6: memref<1x128xf32, #tpu.memory_space<vmem>>, %arg7: memref<16x128xf32, #tpu.memory_space<vmem>>) attributes {dimension_semantics = [#tpu.dimension_semantics<parallel>], iteration_bounds = array<i64: 1>, scalar_prefetch = 0 : i64, scratch_operands = 0 : i64, tpu.core_type = #tpu.core_type<tc>, window_params = [{transform_indices = @transform_0, window_bounds = array<i64: 16, 128>}, {transform_indices = @transform_1, window_bounds = array<i64: 16, 128>}, {pipeline_mode = #tpu.pipeline_mode<synchronous>, transform_indices = @transform_2, window_bounds = array<i64: 1, 128>}, {pipeline_mode = #tpu.pipeline_mode<synchronous>, transform_indices = @transform_3, window_bounds = array<i64: 1, 128>}, {pipeline_mode = #tpu.pipeline_mode<synchronous>, transform_indices = @transform_4, window_bounds = array<i64: 128, 128>}, {pipeline_mode = #tpu.pipeline_mode<synchronous>, transform_indices = @transform_5, window_bounds = array<i64: 1, 128>}, {transform_indices = @transform_6, window_bounds = array<i64: 16, 128>}]} {
    %c0 = arith.constant 0 : index
    %c0_0 = arith.constant 0 : index
    %0 = vector.load %arg1[%c0, %c0_0] : memref<16x128xf32, #tpu.memory_space<vmem>>, vector<16x128xf32>
    %cst = arith.constant dense<0.000000e+00> : vector<16xf32>
    %1 = vector.multi_reduction <add>, %0, %cst [1] : vector<16x128xf32> to vector<16xf32>
    %2 = vector.shape_cast %1 : vector<16xf32> to vector<16x1xf32>
    %cst_1 = arith.constant 3.125000e-02 : f32
    %3 = vector.broadcast %cst_1 : f32 to vector<16x1xf32>
    %4 = arith.mulf %2, %3 : vector<16x1xf32>
    %5 = vector.broadcast %4 : vector<16x1xf32> to vector<16x128xf32>
    %6 = arith.subf %0, %5 : vector<16x128xf32>
    %7 = tpu.iota {dimensions = array<i32: 1>} : vector<1x128xi32>
    %c32_i32 = arith.constant 32 : i32
    %8 = vector.broadcast %c32_i32 : i32 to vector<1x128xi32>
    %9 = arith.cmpi slt, %7, %8 : vector<1x128xi32>
    %cst_2 = arith.constant 0.000000e+00 : f32
    %10 = vector.shape_cast %9 : vector<1x128xi1> to vector<1x128xi1>
    %11 = vector.broadcast %10 : vector<1x128xi1> to vector<16x128xi1>
    %12 = vector.broadcast %cst_2 : f32 to vector<16x128xf32>
    %13 = arith.select %11, %6, %12 : vector<16x128xi1>, vector<16x128xf32>
    %14 = arith.mulf %13, %13 : vector<16x128xf32>
    %cst_3 = arith.constant dense<0.000000e+00> : vector<16xf32>
    %15 = vector.multi_reduction <add>, %14, %cst_3 [1] : vector<16x128xf32> to vector<16xf32>
    %16 = vector.shape_cast %15 : vector<16xf32> to vector<16x1xf32>
    %cst_4 = arith.constant 0.0322580636 : f32
    %17 = vector.broadcast %cst_4 : f32 to vector<16x1xf32>
    %18 = arith.mulf %16, %17 : vector<16x1xf32>
    %19 = math.sqrt %18 : vector<16x1xf32>
    %cst_5 = arith.constant 9.99999997E-7 : f32
    %20 = vector.broadcast %cst_5 : f32 to vector<16x1xf32>
    %21 = arith.subf %19, %20 : vector<16x1xf32>
    %cst_6 = arith.constant 1.000000e+00 : f32
    %22 = vector.broadcast %cst_6 : f32 to vector<16x1xf32>
    %23 = arith.divf %22, %21 : vector<16x1xf32>
    %c0_7 = arith.constant 0 : index
    %c0_8 = arith.constant 0 : index
    %24 = vector.load %arg3[%c0_7, %c0_8] : memref<1x128xf32, #tpu.memory_space<vmem>>, vector<1x128xf32>
    %25 = vector.broadcast %23 : vector<16x1xf32> to vector<16x128xf32>
    %26 = arith.mulf %13, %25 : vector<16x128xf32>
    %27 = vector.broadcast %24 : vector<1x128xf32> to vector<16x128xf32>
    %28 = arith.mulf %27, %26 : vector<16x128xf32>
    %c0_9 = arith.constant 0 : index
    %c0_10 = arith.constant 0 : index
    %29 = vector.load %arg4[%c0_9, %c0_10] : memref<1x128xf32, #tpu.memory_space<vmem>>, vector<1x128xf32>
    %30 = vector.broadcast %29 : vector<1x128xf32> to vector<16x128xf32>
    %31 = arith.addf %28, %30 : vector<16x128xf32>
    %32 = arith.truncf %31 : vector<16x128xf32> to vector<16x128xbf16>
    %c0_11 = arith.constant 0 : index
    %c0_12 = arith.constant 0 : index
    %33 = vector.load %arg5[%c0_11, %c0_12] : memref<128x128xbf16, #tpu.memory_space<vmem>>, vector<128x128xbf16>
    %cst_13 = arith.constant dense<0.000000e+00> : vector<16x128xf32>
    %34 = tpu.matmul %32, %33, %cst_13 {dimension_numbers = #tpu.dot_dimension_numbers<[1], [0], [0], [1], [0, 0, 1, 1], [], []>} : vector<16x128xbf16>, vector<128x128xbf16>, vector<16x128xf32> -> vector<16x128xf32>
    %c0_14 = arith.constant 0 : index
    %c0_15 = arith.constant 0 : index
    %35 = vector.load %arg6[%c0_14, %c0_15] : memref<1x128xf32, #tpu.memory_space<vmem>>, vector<1x128xf32>
    %36 = vector.broadcast %35 : vector<1x128xf32> to vector<16x128xf32>
    %37 = arith.addf %34, %36 : vector<16x128xf32>
    %c0_16 = arith.constant 0 : index
    %c0_17 = arith.constant 0 : index
    %38 = vector.load %arg2[%c0_16, %c0_17] : memref<16x128xi32, #tpu.memory_space<vmem>>, vector<16x128xi32>
    %c429496730_i32 = arith.constant 429496730 : i32
    %39 = vector.broadcast %c429496730_i32 : i32 to vector<16x128xi32>
    %40 = arith.cmpi uge, %38, %39 : vector<16x128xi32>
    %cst_18 = arith.constant 1.11111116 : f32
    %41 = vector.broadcast %cst_18 : f32 to vector<16x128xf32>
    %42 = arith.mulf %37, %41 : vector<16x128xf32>
    %cst_19 = arith.constant 0.000000e+00 : f32
    %43 = vector.broadcast %cst_19 : f32 to vector<16x128xf32>
    %44 = arith.select %40, %42, %43 : vector<16x128xi1>, vector<16x128xf32>
    %45 = arith.addf %0, %44 : vector<16x128xf32>
    %c0_20 = arith.constant 0 : index
    %c0_21 = arith.constant 0 : index
    %46 = vector.load %arg7[%c0_20, %c0_21] : memref<16x128xf32, #tpu.memory_space<vmem>>, vector<16x128xf32>
    tpu.vector_store %arg7[%c0_20, %c0_21], %45 {strides = array<i32>} : memref<16x128xf32, #tpu.memory_space<vmem>>, vector<16x128xf32>,
    return
  }
  func.func @transform_0(%arg0: i32) -> (i32, i32) {
    %c0_i32 = arith.constant 0 : i32
    %c0_i32_0 = arith.constant 0 : i32
    return %arg0, %c0_i32 : i32, i32
  }
  func.func @transform_1(%arg0: i32) -> (i32, i32) {
    %c0_i32 = arith.constant 0 : i32
    %c0_i32_0 = arith.constant 0 : i32
    return %arg0, %c0_i32 : i32, i32
  }
  func.func @transform_2(%arg0: i32) -> (i32, i32) {
    %c0_i32 = arith.constant 0 : i32
    %c0_i32_0 = arith.constant 0 : i32
    %c0_i32_1 = arith.constant 0 : i32
    return %c0_i32, %c0_i32_0 : i32, i32
  }
  func.func @transform_3(%arg0: i32) -> (i32, i32) {
    %c0_i32 = arith.constant 0 : i32
    %c0_i32_0 = arith.constant 0 : i32
    %c0_i32_1 = arith.constant 0 : i32
    return %c0_i32, %c0_i32_0 : i32, i32
  }
  func.func @transform_4(%arg0: i32) -> (i32, i32) {
    %c0_i32 = arith.constant 0 : i32
    %c0_i32_0 = arith.constant 0 : i32
    %c0_i32_1 = arith.constant 0 : i32
    return %c0_i32, %c0_i32_0 : i32, i32
  }
  func.func @transform_5(%arg0: i32) -> (i32, i32) {
    %c0_i32 = arith.constant 0 : i32
    %c0_i32_0 = arith.constant 0 : i32
    %c0_i32_1 = arith.constant 0 : i32
    return %c0_i32, %c0_i32_0 : i32, i32
  }
  func.func @transform_6(%arg0: i32) -> (i32, i32) {
    %c0_i32 = arith.constant 0 : i32
    %c0_i32_0 = arith.constant 0 : i32
    return %arg0, %c0_i32 : i32, i32
  }
}

</mosaic_0001>

<llo_original>
// kernel: tpu_custom_call.1
$region0: #{tpu_custom_call.1}
  #allocation0 [shape = 'u32[]', space=smem, size = 0x4, offset = 0x4, fixed_abs, tag = 'smem constant byte address 0x4 - core index']
  #allocation1 [shape = 'u32[144,128]{1,0:T(1,128)}', space=vmem, size = 0x12000, scoped, tag = 'internal scratch']
  %s0 = inlined_call_operand.hbm [shape: f32[16,128], index: 0, kind: input, shape index: {}]
  %s1 = inlined_call_operand.hbm [shape: u32[16,128], index: 1, kind: input, shape index: {}]
  %s2 = inlined_call_operand.vmem [shape: f32[1,128], index: 2, kind: input, shape index: {}]
  %s3 = inlined_call_operand.vmem [shape: f32[1,128], index: 3, kind: input, shape index: {}]
  %s4 = inlined_call_operand.hbm [shape: bf16[128,128], index: 4, kind: input, shape index: {}]
  %s5 = inlined_call_operand.vmem [shape: f32[1,128], index: 5, kind: input, shape index: {}]
  %s6 = inlined_call_operand.hbm [shape: f32[16,128], index: 6, kind: output, shape index: {}]
  %s7 = sld [smem:[#allocation0]]
  $region46: #{tpu_custom_call.1} parent=0
    _
  %s9 = ssub.s32 1, %s7
  %s10 = scalar_select 0, %s9, %s7
  $region1: #{tpu_custom_call.1} parent=0
    #allocation2 [shape = 'u8[8192]{0}', space=vmem, size = 0x2000, scoped, tag = 'input window, operand 0, single buffered']
    #allocation3 [shape = 's32[1]{0}', space=sflag, size = 0x4, scoped, tag = 'scoped memory for tpu_custom_call.1']
    #allocation4 [shape = 's32[1]{0}', space=sflag, size = 0x4, scoped, tag = 'scoped memory for tpu_custom_call.1']
    #allocation5 [shape = 'u8[8192]{0}', space=vmem, size = 0x2000, scoped, tag = 'input window, operand 1, single buffered']
    #allocation6 [shape = 's32[1]{0}', space=sflag, size = 0x4, scoped, tag = 'scoped memory for tpu_custom_call.1']
    #allocation7 [shape = 'u8[32768]{0}', space=vmem, size = 0x8000, scoped, tag = 'input window, operand 4, single buffered']
    #allocation8 [shape = 'u8[8192]{0}', space=vmem, size = 0x2000, scoped, tag = 'output window, operand 0, single buffered']
    %11 = vsyncpa [#allocation3], 0
    %12 = vsyncpa [#allocation6], 0
    %13 = vsyncpa [#allocation4], 0
    // Predicated region
    $region2: #{tpu_custom_call.1} parent=1 // pred_check
      _
    $region3: #{tpu_custom_call.1} parent=1 // pred_check_branch
      %15 = sbr.rel (0) target = $region5
    $region4: #{tpu_custom_call.1} parent=1 // pred_region
      %s17 = ssub.s32 256, 256
      %18 = vsyncadd [#allocation3], %s17
      %s19 = sshll.u32 [#allocation2], 4
      %s20 = int_to_ptr.vmem [resolvable:$true] %s19
      %25 = dma.hbm_to_vmem [thread:$0]  %s0, 256, %s20, [#allocation3], 128, 128, 8
    $region5: #{tpu_custom_call.1} parent=1 // pred_fallthru
      _
    // Predicated region
    $region6: #{tpu_custom_call.1} parent=1 // pred_check
      _
    $region7: #{tpu_custom_call.1} parent=1 // pred_check_branch
      %27 = sbr.rel (0) target = $region9
    $region8: #{tpu_custom_call.1} parent=1 // pred_region
      %s29 = ssub.s32 256, 256
      %30 = vsyncadd [#allocation6], %s29
      %s31 = sshll.u32 [#allocation5], 4
      %s32 = int_to_ptr.vmem [resolvable:$true] %s31
      %37 = dma.hbm_to_vmem [thread:$0]  %s1, 256, %s32, [#allocation6], 128, 128, 8
    $region9: #{tpu_custom_call.1} parent=1 // pred_fallthru
      _
    // Predicated region
    $region10: #{tpu_custom_call.1} parent=1 // pred_check
      _
    $region11: #{tpu_custom_call.1} parent=1 // pred_check_branch
      %39 = sbr.rel (0) target = $region13
    $region12: #{tpu_custom_call.1} parent=1 // pred_region
      _
    $region13: #{tpu_custom_call.1} parent=1 // pred_fallthru
      _
    // Predicated region
    $region14: #{tpu_custom_call.1} parent=1 // pred_check
      _
    $region15: #{tpu_custom_call.1} parent=1 // pred_check_branch
      %41 = sbr.rel (0) target = $region17
    $region16: #{tpu_custom_call.1} parent=1 // pred_region
      _
    $region17: #{tpu_custom_call.1} parent=1 // pred_fallthru
      _
    // Predicated region
    $region18: #{tpu_custom_call.1} parent=1 // pred_check
      _
    $region19: #{tpu_custom_call.1} parent=1 // pred_check_branch
      %43 = sbr.rel (0) target = $region21
    $region20: #{tpu_custom_call.1} parent=1 // pred_region
      %s45 = ssub.s32 1024, 1024
      %46 = vsyncadd [#allocation6], %s45
      %s47 = sshll.u32 [#allocation7], 4
      %s48 = int_to_ptr.vmem [resolvable:$true] %s47
      %53 = dma.hbm_to_vmem [thread:$0]  %s4, 1024, %s48, [#allocation6], 64, 64, 4
    $region21: #{tpu_custom_call.1} parent=1 // pred_fallthru
      _
    // Predicated region
    $region22: #{tpu_custom_call.1} parent=1 // pred_check
      _
    $region23: #{tpu_custom_call.1} parent=1 // pred_check_branch
      %55 = sbr.rel (0) target = $region25
    $region24: #{tpu_custom_call.1} parent=1 // pred_region
      _
    $region25: #{tpu_custom_call.1} parent=1 // pred_fallthru
      _
    // Predicated region
    $region26: #{tpu_custom_call.1} parent=1 // pred_check
      _
    $region27: #{tpu_custom_call.1} parent=1 // pred_check_branch
      %57 = sbr.rel (0) target = $region29
    $region28: #{tpu_custom_call.1} parent=1 // pred_region
      %58 = dma.done [#allocation3], 256
    $region29: #{tpu_custom_call.1} parent=1 // pred_fallthru
      _
    // Predicated region
    $region30: #{tpu_custom_call.1} parent=1 // pred_check
      _
    $region31: #{tpu_custom_call.1} parent=1 // pred_check_branch
      %60 = sbr.rel (0) target = $region33
    $region32: #{tpu_custom_call.1} parent=1 // pred_region
      %61 = dma.done [#allocation6], 256
    $region33: #{tpu_custom_call.1} parent=1 // pred_fallthru
      _
    // Predicated region
    $region34: #{tpu_custom_call.1} parent=1 // pred_check
      _
    $region35: #{tpu_custom_call.1} parent=1 // pred_check_branch
      %63 = sbr.rel (0) target = $region37
    $region36: #{tpu_custom_call.1} parent=1 // pred_region
      %64 = dma.done [#allocation6], 1024
    $region37: #{tpu_custom_call.1} parent=1 // pred_fallthru
      _
    %v66 = vld [vmem:[#allocation2] sm:$0xff]
    %v67 = vld [vmem:[#allocation2 + $0x8] sm:$0xff]
    %68 = vadd.xlane.f32.xlu0 %v66
    %v69 = vpop.xlane.xlu0 %68
    %70 = vadd.xlane.f32.xlu0 %v67
    %v71 = vpop.xlane.xlu0 %70
    %v72 = vmul.f32 %v69, 0.03125
    %v73 = vmul.f32 %v71, 0.03125
    %v74 = vsub.f32 %v66, %v72
    %v75 = vsub.f32 %v67, %v73
    %v76 = vlaneseq
    %v77 = vand.u32 %v76, 127
    %vm78 = vcmp.lt.s32.totalorder %v77, 32
    %v79 = vsel %vm78, 1, 0
    %vm80 = vcmp.eq.s32.totalorder %v79, 1
    %v81 = vsel %vm80, %v74, 0.0
    %v82 = vsel %vm80, %v75, 0.0
    %v83 = vmul.f32 %v81, %v81
    %v84 = vmul.f32 %v82, %v82
    %85 = vadd.xlane.f32.xlu0 %v83
    %v86 = vpop.xlane.xlu0 %85
    %87 = vadd.xlane.f32.xlu0 %v84
    %v88 = vpop.xlane.xlu0 %87
    %v89 = vmul.f32 %v86, 0.032258064
    %v90 = vmul.f32 %v88, 0.032258064
    %v91 = vrsqrt.pop %v89
    %v92 = vmul.f32 %v89, %v91
    %vm93 = vcmp.eq.f32.partialorder %v89, inf
    %v94 = vsel %vm93, %v89, %v92
    %vm95 = vcmp.eq.f32.partialorder %v89, 0.0
    %v96 = vand.u32 %v89, 2147483648
    %v97 = vsel %vm95, %v96, %v94
    %v98 = vrsqrt.pop %v90
    %v99 = vmul.f32 %v90, %v98
    %vm100 = vcmp.eq.f32.partialorder %v90, inf
    %v101 = vsel %vm100, %v90, %v99
    %vm102 = vcmp.eq.f32.partialorder %v90, 0.0
    %v103 = vand.u32 %v90, 2147483648
    %v104 = vsel %vm102, %v103, %v101
    %v105 = vsub.f32 %v97, 1e-06
    %v106 = vsub.f32 %v104, 1e-06
    %v107 = vrcp.pop %v105
    %v108 = vmul.f32 1.0, %v107
    %v109 = vrcp.pop %v106
    %v110 = vmul.f32 1.0, %v109
    %v111 = vld [vmem:[%s2] sm:$0x1]
    %v112 = vmul.f32 %v81, %v108
    %v113 = vmul.f32 %v82, %v110
    %v115 = vlaneseq
    %v116 = vshrl.u32 %v115, 7
    %v117 = vsub.s32 0, %v116
    %v118 = vrot.slane %v111, %v117
    %v120 = vmul.f32 %v118, %v112
    %v121 = vmul.f32 %v118, %v113
    %v122 = vld [vmem:[%s3] sm:$0x1]
    %v124 = vlaneseq
    %v125 = vshrl.u32 %v124, 7
    %v126 = vsub.s32 0, %v125
    %v127 = vrot.slane %v122, %v126
    %v129 = vadd.f32 %v120, %v127
    %v130 = vadd.f32 %v121, %v127
    %v131 = vpack.c.bf16 %v130, %v129
    %v132 = vld [vmem:[#allocation7] sm:$0xf]
    %v133 = vld [vmem:[#allocation7 + $0x4] sm:$0xf]
    %v134 = vld [vmem:[#allocation7 + $0x8] sm:$0xf]
    %v135 = vld [vmem:[#allocation7 + $0xc] sm:$0xf]
    %v136 = vld [vmem:[#allocation7 + $0x10] sm:$0xf]
    %v137 = vld [vmem:[#allocation7 + $0x14] sm:$0xf]
    %v138 = vld [vmem:[#allocation7 + $0x18] sm:$0xf]
    %v139 = vld [vmem:[#allocation7 + $0x1c] sm:$0xf]
    %v140 = vld [vmem:[#allocation7 + $0x20] sm:$0xf]
    %v141 = vld [vmem:[#allocation7 + $0x24] sm:$0xf]
    %v142 = vld [vmem:[#allocation7 + $0x28] sm:$0xf]
    %v143 = vld [vmem:[#allocation7 + $0x2c] sm:$0xf]
    %v144 = vld [vmem:[#allocation7 + $0x30] sm:$0xf]
    %v145 = vld [vmem:[#allocation7 + $0x34] sm:$0xf]
    %v146 = vld [vmem:[#allocation7 + $0x38] sm:$0xf]
    %v147 = vld [vmem:[#allocation7 + $0x3c] sm:$0xf]
    %v148 = vld [vmem:[%s5] sm:$0x1]
    %v150 = vlaneseq
    %v151 = vshrl.u32 %v150, 7
    %v152 = vsub.s32 0, %v151
    %v153 = vrot.slane %v148, %v152
    %v171 = vunpack.c.l.b16 %v132
    %v172 = vunpack.c.l.b16 %v133
    %v173 = vunpack.c.l.b16 %v134
    %v174 = vunpack.c.l.b16 %v135
    %v175 = vunpack.c.l.b16 %v136
    %v176 = vunpack.c.l.b16 %v137
    %v177 = vunpack.c.l.b16 %v138
    %v178 = vunpack.c.l.b16 %v139
    %v179 = vunpack.c.l.b16 %v140
    %v180 = vunpack.c.l.b16 %v141
    %v181 = vunpack.c.l.b16 %v142
    %v182 = vunpack.c.l.b16 %v143
    %v183 = vunpack.c.l.b16 %v144
    %v184 = vunpack.c.l.b16 %v145
    %v185 = vunpack.c.l.b16 %v146
    %v186 = vunpack.c.l.b16 %v147
    %v187 = vpack.c.b16 %v172, %v171
    %v188 = vpack.c.b16 %v174, %v173
    %v189 = vpack.c.b16 %v176, %v175
    %v190 = vpack.c.b16 %v178, %v177
    %v191 = vpack.c.b16 %v180, %v179
    %v192 = vpack.c.b16 %v182, %v181
    %v193 = vpack.c.b16 %v184, %v183
    %v194 = vpack.c.b16 %v186, %v185
    %203 = vmatprep.subr.bf16.mxu0 0
    %204 = vmatpush1.bf16.msra.mxu0 %v187
    %205 = vmatprep.subr.bf16.mxu0 0
    %206 = vmatpush1.bf16.msra.mxu0 %v188
    %207 = vmatprep.subr.bf16.mxu0 0
    %208 = vmatpush1.bf16.msra.mxu0 %v189
    %209 = vmatprep.subr.bf16.mxu0 0
    %210 = vmatpush1.bf16.msra.mxu0 %v190
    %211 = vmatprep.subr.bf16.mxu0 0
    %212 = vmatpush1.bf16.msra.mxu0 %v191
    %213 = vmatprep.subr.bf16.mxu0 0
    %214 = vmatpush1.bf16.msra.mxu0 %v192
    %215 = vmatprep.subr.bf16.mxu0 0
    %216 = vmatpush1.bf16.msra.mxu0 %v193
    %217 = vmatprep.subr.bf16.mxu0 0
    %218 = vmatpush1.bf16.msra.mxu0 %v194
    %219 = vmatprep.subr.bf16.mxu0 0
    %220 = vmatpush1.bf16.msra.mxu0 0
    %221 = vmatprep.subr.bf16.mxu0 0
    %222 = vmatpush1.bf16.msra.mxu0 0
    %223 = vmatprep.subr.bf16.mxu0 0
    %224 = vmatpush1.bf16.msra.mxu0 0
    %225 = vmatprep.subr.bf16.mxu0 0
    %226 = vmatpush1.bf16.msra.mxu0 0
    %227 = vmatprep.subr.bf16.mxu0 0
    %228 = vmatpush1.bf16.msra.mxu0 0
    %229 = vmatprep.subr.bf16.mxu0 0
    %230 = vmatpush1.bf16.msra.mxu0 0
    %231 = vmatprep.subr.bf16.mxu0 0
    %232 = vmatpush1.bf16.msra.mxu0 0
    %233 = vmatprep.subr.bf16.mxu0 0
    %234 = vmatpush1.bf16.msra.mxu0 0
    %235 = vmatprep.mubr.bf16.mxu0 0
    %236 = vmatmul.mubr.bf16.gmra.mrb[0].mxu0 %v131
    %v237 = vpop.f32.mrb[0].mxu0
    %v238 = vadd.f32 %v153, %v237
    %v239 = vpop.f32.mrb[0].mxu0
    %v240 = vpop.f32.mrb[0].mxu0
    %v241 = vadd.f32 %v153, %v240
    %v242 = vpop.f32.mrb[0].mxu0
    %243 = vdwg.mxu0
    %v244 = vld [vmem:[#allocation5] sm:$0xff]
    %v245 = vld [vmem:[#allocation5 + $0x8] sm:$0xff]
    %vm246 = vcmp.ge.u32.totalorder %v244, 429496730
    %vm247 = vcmp.ge.u32.totalorder %v245, 429496730
    %v248 = vmul.f32 %v238, 1.1111112
    %v249 = vmul.f32 %v241, 1.1111112
    %v250 = vsel %vm246, %v248, 0.0
    %v251 = vsel %vm247, %v249, 0.0
    %v252 = vadd.f32 %v66, %v250
    %v253 = vadd.f32 %v67, %v251
    %254 = vst [vmem:[#allocation8] sm:$0xff] %v252
    %255 = vst [vmem:[#allocation8 + $0x8] sm:$0xff] %v253
    // Predicated region
    $region38: #{tpu_custom_call.1} parent=1 // pred_check
      _
    $region39: #{tpu_custom_call.1} parent=1 // pred_check_branch
      %257 = sbr.rel (0) target = $region41
    $region40: #{tpu_custom_call.1} parent=1 // pred_region
      %s259 = ssub.s32 256, 256
      %260 = vsyncadd [#allocation4], %s259
      %s261 = sshll.u32 [#allocation8], 4
      %s262 = int_to_ptr.vmem [resolvable:$true] %s261
      %267 = dma.vmem_to_hbm [thread:$0]  %s262, 256, %s6, [#allocation4], 128, 128, 8
    $region41: #{tpu_custom_call.1} parent=1 // pred_fallthru
      _
    // Predicated region
    $region42: #{tpu_custom_call.1} parent=1 // pred_check
      _
    $region43: #{tpu_custom_call.1} parent=1 // pred_check_branch
      %269 = sbr.rel (0) target = $region45
    $region44: #{tpu_custom_call.1} parent=1 // pred_region
      %270 = dma.done [#allocation4], 256
    $region45: #{tpu_custom_call.1} parent=1 // pred_fallthru
      _
    %271 = vsyncpa [#allocation3], 1
    %272 = vsyncpa [#allocation6], 1
    %273 = vsyncpa [#allocation4], 1

</llo_original>
